<compile_context>
chip_gen: v7x
topology: tpu7x:2x2x1
jax: 0.10.0
libtpu: 0.0.40
codegen_flags: <defaults>
</compile_context>

<pallas_src>
import jax
import jax.numpy as jnp
from jax.experimental import pallas as pl
from jax.experimental.pallas import tpu as pltpu


_TARGET_TILE_BYTES = 2 << 20   # ~2 MiB per buffer; in+out double-buffered => ~8 MiB resident
_LANE = 128


def _copy_kernel(x_ref, o_ref):
    # Pure lane-dense copy of one tile. No relayout, no compute.
    o_ref[...] = x_ref[...]


def _round_down(x: int, m: int) -> int:
    return (x // m) * m


def feature_flatten(x: jax.Array, *, min_bytes_for_kernel: int = 1 << 20) -> jax.Array:
    """Pallas equivalent of FeatureFlaten().forward: x.view(-1, prod(shape[1:]))."""
    b = x.shape[0]
    flat = 1
    for s in x.shape[1:]:
        flat *= s
    total = b * flat
    dtype = x.dtype
    itemsize = jnp.dtype(dtype).itemsize

    # Degenerate / tiny inputs: the flatten is a free metadata-only reshape and
    # fixed pallas_call + grid overhead would dwarf the copy.
    if total == 0 or total * itemsize < min_bytes_for_kernel:
        return x.reshape(b, flat)

    # dtype-aware alignment: sub-32-bit dtypes pack along sublanes.
    scale = max(1, 4 // itemsize)          # f32 -> 1, bf16 -> 2, int8/fp8 -> 4
    align = 8 * scale                      # sublane multiple for full vregs
    lane_cands = [c * scale for c in (8192, 4096, 2048, 1024, 512, 256, 128)]

    # ------------------------------------------------------------------
    # Preferred path: fully flattened lane-dense slab (rows, tf).
    # tf is a large multiple of 128 dividing `total`, chosen so rows >= align
    # (full sublane occupancy). Grid is 1-D over row blocks.
    # ------------------------------------------------------------------
    divisors = [tf for tf in lane_cands if total % tf == 0]
    good = [tf for tf in divisors if total // tf >= align]
    if good:
        tf = max(good)                     # widest lane slab that still fills sublanes
    elif divisors:
        tf = min(divisors)                 # tiny total: maximize sublane occupancy
    else:
        tf = None

    if tf is not None:
        rows = total // tf
        tb_target = max(align,
                        _round_down(max(align, _TARGET_TILE_BYTES // (tf * itemsize)), align))
        tb = rows if rows <= tb_target else tb_target   # full-dim block exempt from 8-rule
        grid = (pl.cdiv(rows, tb),)

        out = pl.pallas_call(
            _copy_kernel,
            out_shape=jax.ShapeDtypeStruct((rows, tf), dtype),
            grid_spec=pltpu.PrefetchScalarGridSpec(
                num_scalar_prefetch=0,
                grid=grid,
                in_specs=[pl.BlockSpec((tb, tf), lambda i: (i, 0))],
                out_specs=pl.BlockSpec((tb, tf), lambda i: (i, 0)),
            ),
            compiler_params=pltpu.CompilerParams(
                dimension_semantics=("parallel",),        # shard row blocks across TCs (v7x)
                vmem_limit_bytes=32 * 1024 * 1024,
            ),
        )(x.reshape(rows, tf))
        return out.reshape(b, flat)

    # ------------------------------------------------------------------
    # Fallback: (b, flat) slab with fixed, bounded tiles and cdiv grids.
    # At most one masked edge block per axis; tile bytes stay ~2 MiB.
    # ------------------------------------------------------------------
    if flat >= _LANE:
        tf_tile = min(_round_down(flat, _LANE), lane_cands[0])
    else:
        tf_tile = flat                         # full-extent lane dim (exempt from 128-rule)
    tb_target = max(align,
                    _round_down(max(align, _TARGET_TILE_BYTES // (tf_tile * itemsize)), align))
    if b >= align:
        tb = min(tb_target, _round_down(b, align))
    else:
        tb = b                                 # full-extent sublane dim (exempt from 8-rule)

    # Put the (usually much larger) lane-block axis first so the leading
    # parallel axis has >= 2 blocks for v7x TC sharding.
    grid = (pl.cdiv(flat, tf_tile), pl.cdiv(b, tb))

    out = pl.pallas_call(
        _copy_kernel,
        out_shape=jax.ShapeDtypeStruct((b, flat), dtype),
        grid_spec=pltpu.PrefetchScalarGridSpec(
            num_scalar_prefetch=0,
            grid=grid,
            in_specs=[pl.BlockSpec((tb, tf_tile), lambda j, i: (i, j))],
            out_specs=pl.BlockSpec((tb, tf_tile), lambda j, i: (i, j)),
        ),
        compiler_params=pltpu.CompilerParams(
            dimension_semantics=("parallel", "parallel"),
            vmem_limit_bytes=32 * 1024 * 1024,
        ),
    )(x.reshape(b, flat))
    return out


if __name__ == "__main__":
    key = jax.random.PRNGKey(0)

    # Small NCHW input consistent with the module's forward.
    B, C, H, W = 2, 4, 16, 16
    x = jax.random.normal(key, (B, C, H, W), dtype=jnp.float32)

    # Force the kernel path (the default would short-circuit tiny inputs to a
    # free metadata reshape).
    out = feature_flatten(x, min_bytes_for_kernel=0)
    out = jax.block_until_ready(out)

    ref = x.reshape(B, C * H * W)
    assert out.shape == (B, C * H * W), out.shape
    assert out.dtype == x.dtype, out.dtype
    assert jnp.array_equal(out, ref), "mismatch vs reference flatten (slab path)"

    # Also exercise the (b, flat) fallback path (flat not a 128 multiple).
    B2, C2, H2, W2 = 2, 3, 5, 5
    x2 = jax.random.normal(jax.random.PRNGKey(1), (B2, C2, H2, W2), dtype=jnp.float32)
    out2 = jax.block_until_ready(feature_flatten(x2, min_bytes_for_kernel=0))
    ref2 = x2.reshape(B2, C2 * H2 * W2)
    assert out2.shape == (B2, C2 * H2 * W2), out2.shape
    assert jnp.array_equal(out2, ref2), "mismatch vs reference flatten (fallback path)"

    print("KERNEL_OK")
</pallas_src>

<mosaic_0001>
module attributes {stable_mosaic.version = 11 : i64} {
  func.func @_copy_kernel(%arg0: i32, %arg1: memref<8x256xf32, #tpu.memory_space<vmem>>, %arg2: memref<8x256xf32, #tpu.memory_space<vmem>>) attributes {dimension_semantics = [#tpu.dimension_semantics<parallel>], iteration_bounds = array<i64: 1>, scalar_prefetch = 0 : i64, scratch_operands = 0 : i64, tpu.core_type = #tpu.core_type<tc>, window_params = [{transform_indices = @transform_0, window_bounds = array<i64: 8, 256>}, {transform_indices = @transform_1, window_bounds = array<i64: 8, 256>}]} {
    %c0 = arith.constant 0 : index
    %c0_0 = arith.constant 0 : index
    %0 = vector.load %arg1[%c0, %c0_0] : memref<8x256xf32, #tpu.memory_space<vmem>>, vector<8x256xf32>
    %c0_1 = arith.constant 0 : index
    %c0_2 = arith.constant 0 : index
    %1 = vector.load %arg2[%c0_1, %c0_2] : memref<8x256xf32, #tpu.memory_space<vmem>>, vector<8x256xf32>
    tpu.vector_store %arg2[%c0_1, %c0_2], %0 {strides = array<i32>} : memref<8x256xf32, #tpu.memory_space<vmem>>, vector<8x256xf32>,
    return
  }
  func.func @transform_0(%arg0: i32) -> (i32, i32) {
    %c0_i32 = arith.constant 0 : i32
    %c0_i32_0 = arith.constant 0 : i32
    return %arg0, %c0_i32 : i32, i32
  }
  func.func @transform_1(%arg0: i32) -> (i32, i32) {
    %c0_i32 = arith.constant 0 : i32
    %c0_i32_0 = arith.constant 0 : i32
    return %arg0, %c0_i32 : i32, i32
  }
}

</mosaic_0001>

<llo_original>
// kernel: tpu_custom_call.1
$region0: #{tpu_custom_call.1}
  #allocation0 [shape = 'u32[]', space=smem, size = 0x4, offset = 0x4, fixed_abs, tag = 'smem constant byte address 0x4 - core index']
  #allocation1 [shape = 'u32[144,128]{1,0:T(1,128)}', space=vmem, size = 0x12000, scoped, tag = 'internal scratch']
  %s0 = inlined_call_operand.hbm [shape: f32[8,256], index: 0, kind: input, shape index: {}]
  %s1 = inlined_call_operand.hbm [shape: f32[8,256], index: 1, kind: output, shape index: {}]
  %s2 = sld [smem:[#allocation0]]
  $region18: #{tpu_custom_call.1} parent=0
    _
  %s4 = ssub.s32 1, %s2
  %s5 = scalar_select 0, %s4, %s2
  $region1: #{tpu_custom_call.1} parent=0
    #allocation2 [shape = 'u8[8192]{0}', space=vmem, size = 0x2000, scoped, tag = 'input window, operand 0, single buffered']
    #allocation3 [shape = 's32[1]{0}', space=sflag, size = 0x4, scoped, tag = 'scoped memory for tpu_custom_call.1']
    #allocation4 [shape = 's32[1]{0}', space=sflag, size = 0x4, scoped, tag = 'scoped memory for tpu_custom_call.1']
    #allocation5 [shape = 'u8[8192]{0}', space=vmem, size = 0x2000, scoped, tag = 'output window, operand 0, single buffered']
    %6 = vsyncpa [#allocation3], 0
    %7 = vsyncpa [#allocation4], 0
    // Predicated region
    $region2: #{tpu_custom_call.1} parent=1 // pred_check
      _
    $region3: #{tpu_custom_call.1} parent=1 // pred_check_branch
      %9 = sbr.rel (0) target = $region5
    $region4: #{tpu_custom_call.1} parent=1 // pred_region
      %s11 = ssub.s32 256, 256
      %12 = vsyncadd [#allocation3], %s11
      %s14 = sshll.u32 [#allocation2], 4
      %s15 = int_to_ptr.vmem [resolvable:$true] %s14
      %17 = dma.hbm_to_vmem [thread:$0]  %s0, 256, %s15, [#allocation3]
    $region5: #{tpu_custom_call.1} parent=1 // pred_fallthru
      _
    // Predicated region
    $region6: #{tpu_custom_call.1} parent=1 // pred_check
      _
    $region7: #{tpu_custom_call.1} parent=1 // pred_check_branch
      %19 = sbr.rel (0) target = $region9
    $region8: #{tpu_custom_call.1} parent=1 // pred_region
      %20 = dma.done [#allocation3], 256
    $region9: #{tpu_custom_call.1} parent=1 // pred_fallthru
      _
    %v21 = vld [vmem:[#allocation2] sm:$0xff]
    %v22 = vld [vmem:[#allocation2 + $0x8] sm:$0xff]
    %23 = vst [vmem:[#allocation5] sm:$0xff] %v21
    %24 = vst [vmem:[#allocation5 + $0x8] sm:$0xff] %v22
    // Predicated region
    $region10: #{tpu_custom_call.1} parent=1 // pred_check
      _
    $region11: #{tpu_custom_call.1} parent=1 // pred_check_branch
      %26 = sbr.rel (0) target = $region13
    $region12: #{tpu_custom_call.1} parent=1 // pred_region
      %s28 = ssub.s32 256, 256
      %29 = vsyncadd [#allocation4], %s28
      %s31 = sshll.u32 [#allocation5], 4
      %s32 = int_to_ptr.vmem [resolvable:$true] %s31
      %34 = dma.vmem_to_hbm [thread:$0]  %s32, 256, %s1, [#allocation4]
    $region13: #{tpu_custom_call.1} parent=1 // pred_fallthru
      _
    // Predicated region
    $region14: #{tpu_custom_call.1} parent=1 // pred_check
      _
    $region15: #{tpu_custom_call.1} parent=1 // pred_check_branch
      %36 = sbr.rel (0) target = $region17
    $region16: #{tpu_custom_call.1} parent=1 // pred_region
      %37 = dma.done [#allocation4], 256
    $region17: #{tpu_custom_call.1} parent=1 // pred_fallthru
      _
    %38 = vsyncpa [#allocation3], 1
    %39 = vsyncpa [#allocation4], 1

</llo_original>
